<compile_context>
chip_gen: v5e
topology: v5e:2x2
jax: 0.10.0
libtpu: 0.0.40
codegen_flags: <defaults>
</compile_context>

<pallas_src>
import functools

import jax
import jax.numpy as jnp
from jax.experimental import pallas as pl
from jax.experimental.pallas import tpu as pltpu

LANE = 128  # TPU lane width; C2 tiles are padded to a multiple of this.


# ----------------------------- Pallas kernel ---------------------------------


def _conv_bn_silu_kernel(x_ref, w_ref, scale_ref, bias_ref, o_ref, *,
                         k, s, tm_rows, Wo, fold_taps):
    """One (batch, C2-tile, output-row-tile) grid step.

    x_ref:     (1, Hp, Wp, C1)       bf16  padded NHWC image (whole image; its
                                           block index depends only on n, so it
                                           is re-fetched only when n changes)
    w_ref:     (k*k*C1, tn)          bf16  folded weight slab (C2 zero-padded)
    scale_ref: (1, tn)               f32   folded BN scale
    bias_ref:  (1, tn)               f32   folded BN bias
    o_ref:     (1, tm_rows, Wo, tn)  bf16  lane-dense output row tile
    """
    i = pl.program_id(2)                     # output-row tile index
    C1 = x_ref.shape[-1]
    M = tm_rows * Wo
    win_rows = (tm_rows - 1) * s + k

    h0 = i * (tm_rows * s)
    if (tm_rows * s) % 8 == 0:
        h0 = pl.multiple_of(h0, 8)
    win = x_ref[0, pl.ds(h0, win_rows), :, :]            # (win_rows, Wp, C1)

    # Shifted windows for the k*k filter taps.
    # TODO(synk): for s > 1 these are strided value slices on the sublane axis;
    #             mathematically correct but unvalidated on hardware.
    pieces = []
    for ki in range(k):
        rows = win[ki:ki + (tm_rows - 1) * s + 1:s]      # (tm_rows, Wp, C1)
        for kj in range(k):
            pieces.append(rows[:, kj:kj + (Wo - 1) * s + 1:s, :])   # (tm_rows, Wo, C1)

    if fold_taps:
        # K-folding: all taps side by side on the contraction axis so the whole
        # conv for this tile is ONE MXU matmul with K = k*k*C1 (fills the
        # 256-wide MXU when C1 is small; no accumulator round trips).
        slab = jnp.concatenate(pieces, axis=-1).reshape(M, k * k * C1)
        acc = jnp.dot(slab, w_ref[...], preferred_element_type=jnp.float32)
    else:
        # C1 already fills the MXU contraction: per-tap matmuls accumulated in a
        # local f32 value (no scratch, no read-modify-write through VMEM).
        acc = jnp.dot(pieces[0].reshape(M, C1), w_ref[0:C1, :],
                      preferred_element_type=jnp.float32)
        for t in range(1, k * k):
            acc = acc + jnp.dot(pieces[t].reshape(M, C1),
                                w_ref[t * C1:(t + 1) * C1, :],
                                preferred_element_type=jnp.float32)

    # Folded BatchNorm (inference) + SiLU epilogue in f32, stored as bf16.
    y = acc * scale_ref[...] + bias_ref[...]
    y = y * jax.nn.sigmoid(y)
    o_ref[0] = y.reshape(tm_rows, Wo, -1).astype(o_ref.dtype)


# --------------------------------- Helpers ------------------------------------


def _pick_row_tile(Ho, Wo):
    """Largest divisor of Ho giving ~<=4K output pixels per tile (keeps the
    bf16 out tile / im2col slab at a few hundred KiB even at tn=256)."""
    target = max(1, 4096 // max(Wo, 1))
    best = 1
    for d in range(1, Ho + 1):
        if Ho % d == 0 and d <= target:
            best = d
    return best


def _vmem_limit(Hp, Wp, C1, k, tm_rows, Wo, tn):
    """VMEM limit from the actual block sizes (per review), clipped to device."""
    bf = 2
    need = (2 * Hp * Wp * C1 * bf              # double-buffered padded image
            + 2 * k * k * C1 * tn * bf         # double-buffered weight slab
            + 2 * tm_rows * Wo * tn * bf       # double-buffered bf16 out tile
            + tm_rows * Wo * k * k * C1 * bf   # im2col slab (fold path)
            + tm_rows * Wo * tn * 4            # f32 matmul result / epilogue
            + (2 << 20))                       # headroom for compiler scratch
    try:
        cap = int(pltpu.get_tpu_info().vmem_capacity_bytes)
    except Exception:
        cap = 64 * 1024 * 1024                 # v7x-sized conservative fallback
    return int(min(max(need, 32 * 1024 * 1024), cap - (4 << 20)))


# --------------------------------- Wrapper -------------------------------------


def conv_bn_silu_nhwc(x_nhwc, w_oikk, gamma, beta, run_mean, run_var, *,
                      k, s, p, eps=1e-5, row_tile=None):
    """NHWC core of Conv(c1, c2, k, p, s, act_type='silu', depthwise=False).

    x_nhwc: (N, H, W, C1);  w_oikk: (C2, C1, k, k) (PyTorch layout, bias=False)
    returns (N, Ho, Wo, C2) bf16.
    """
    # TODO(synk): depthwise=True (grouped conv), dilation d != 1 and the 'lrelu'
    #             activation branch are not implemented; only groups=1, d=1, SiLU.
    N, H, W, C1 = x_nhwc.shape
    C2 = w_oikk.shape[0]
    Ho = (H + 2 * p - k) // s + 1
    Wo = (W + 2 * p - k) // s + 1
    Hp, Wp = H + 2 * p, W + 2 * p

    tm_rows = _pick_row_tile(Ho, Wo) if row_tile is None else int(row_tile)
    assert Ho % tm_rows == 0, (Ho, tm_rows)

    C2p = ((C2 + LANE - 1) // LANE) * LANE
    tn = 256 if C2p % 256 == 0 else LANE       # wider N tiles for the 256-wide MXU
    fold_taps = C1 < 128                       # fold k*k taps into K when C1 is small

    # Spatial zero-pad, bf16 for the MXU (single XLA pass).
    # TODO(synk): fuse the pad (and upstream layout change) into the kernel via a
    #             zero-initialized VMEM row window to drop one extra activation
    #             round trip through HBM; a production backbone should also stay
    #             NHWC bf16 end-to-end.
    xp = jnp.pad(x_nhwc.astype(jnp.bfloat16), ((0, 0), (p, p), (p, p), (0, 0)))

    # (C2, C1, kh, kw) -> (kh, kw, C1, C2) -> (k*k*C1, C2p): column order (ki, kj, c1)
    # matches the in-kernel im2col slab; zero-padded along C2 for lane-dense stores.
    w_flat = jnp.transpose(w_oikk, (2, 3, 1, 0)).reshape(k * k * C1, C2)
    w_flat = jnp.pad(w_flat, ((0, 0), (0, C2p - C2))).astype(jnp.bfloat16)

    # Fold BatchNorm (inference, running stats) into per-channel scale/bias.
    scale = (gamma / jnp.sqrt(run_var + eps)).astype(jnp.float32)
    bias = beta.astype(jnp.float32) - run_mean.astype(jnp.float32) * scale
    scale_p = jnp.pad(scale, (0, C2p - C2)).reshape(1, C2p)
    bias_p = jnp.pad(bias, (0, C2p - C2)).reshape(1, C2p)

    kern = functools.partial(_conv_bn_silu_kernel, k=k, s=s, tm_rows=tm_rows,
                             Wo=Wo, fold_taps=fold_taps)

    out = pl.pallas_call(
        kern,
        out_shape=jax.ShapeDtypeStruct((N, Ho, Wo, C2p), jnp.bfloat16),
        grid_spec=pltpu.PrefetchScalarGridSpec(
            num_scalar_prefetch=0,
            grid=(N, C2p // tn, Ho // tm_rows),
            in_specs=[
                # Whole padded image per batch element; block index depends only
                # on n so it is DMA'd once per batch element.
                pl.BlockSpec((1, Hp, Wp, C1), lambda n, j, i: (n, 0, 0, 0)),
                pl.BlockSpec((k * k * C1, tn), lambda n, j, i: (0, j)),
                pl.BlockSpec((1, tn), lambda n, j, i: (0, j)),
                pl.BlockSpec((1, tn), lambda n, j, i: (0, j)),
            ],
            out_specs=pl.BlockSpec((1, tm_rows, Wo, tn),
                                   lambda n, j, i: (n, i, 0, j)),
        ),
        compiler_params=pltpu.CompilerParams(
            dimension_semantics=("parallel", "parallel", "parallel"),
            vmem_limit_bytes=_vmem_limit(Hp, Wp, C1, k, tm_rows, Wo, tn),
        ),
    )(xp, w_flat, scale_p, bias_p)

    return out[..., :C2] if C2p != C2 else out


@functools.partial(jax.jit, static_argnames=("k", "s", "p", "row_tile"))
def conv_forward(x_nchw, w_oikk, gamma, beta, run_mean, run_var, *,
                 k, s, p, eps=1e-5, row_tile=None):
    """Torch-layout adapter: NCHW in -> NCHW bf16 out (matches Conv.forward)."""
    x_nhwc = jnp.transpose(x_nchw, (0, 2, 3, 1))
    y = conv_bn_silu_nhwc(x_nhwc, w_oikk, gamma, beta, run_mean, run_var,
                          k=k, s=s, p=p, eps=eps, row_tile=row_tile)
    return jnp.transpose(y, (0, 3, 1, 2))


# ----------------------------- Pure-JAX reference ------------------------------


def conv_reference(x_nchw, w_oikk, gamma, beta, run_mean, run_var, *, k, s, p,
                   eps=1e-5):
    # Same bf16-quantized operands as the kernel (bf16 in, f32 accumulation).
    xq = x_nchw.astype(jnp.bfloat16).astype(jnp.float32)
    wq = w_oikk.astype(jnp.bfloat16).astype(jnp.float32)
    y = jax.lax.conv_general_dilated(
        xq, wq, window_strides=(s, s), padding=[(p, p), (p, p)],
        dimension_numbers=("NCHW", "OIHW", "NCHW"),
        precision=jax.lax.Precision.HIGHEST)
    scale = (gamma / jnp.sqrt(run_var + eps)).reshape(1, -1, 1, 1)
    bias = (beta - run_mean * gamma / jnp.sqrt(run_var + eps)).reshape(1, -1, 1, 1)
    y = y * scale + bias
    return y * jax.nn.sigmoid(y)


# ----------------------------------- Main --------------------------------------


if __name__ == "__main__":
    # Conv(c1=4, c2=8, k=3, p=1, s=1, act_type='silu', depthwise=False)
    c1, c2, k, p, s = 4, 8, 3, 1, 1
    N, H, W = 2, 16, 16

    key = jax.random.PRNGKey(0)
    kx, kw, kg, kb, km, kv = jax.random.split(key, 6)

    x = jax.random.normal(kx, (N, c1, H, W), dtype=jnp.float32)
    w = jax.random.normal(kw, (c2, c1, k, k), dtype=jnp.float32) * 0.1
    gamma = jax.random.uniform(kg, (c2,), minval=0.5, maxval=1.5)
    beta = jax.random.normal(kb, (c2,)) * 0.1
    run_mean = jax.random.normal(km, (c2,)) * 0.1
    run_var = jax.random.uniform(kv, (c2,), minval=0.5, maxval=1.5)

    # row_tile=4 -> 4 output-row tiles per image; exercises the spatial tiling.
    out = conv_forward(x, w, gamma, beta, run_mean, run_var,
                       k=k, s=s, p=p, row_tile=4)
    out = jax.block_until_ready(out)

    ref = conv_reference(x, w, gamma, beta, run_mean, run_var, k=k, s=s, p=p)
    assert out.shape == (N, c2, H, W), out.shape
    out_f32 = out.astype(jnp.float32)
    max_err = float(jnp.max(jnp.abs(out_f32 - ref)))
    assert jnp.allclose(out_f32, ref, atol=2e-2, rtol=2e-2), max_err

    print("KERNEL_OK")
</pallas_src>

<mosaic_0001>
module attributes {stable_mosaic.version = 11 : i64} {
  func.func @_conv_bn_silu_kernel(%arg0: i32, %arg1: i32, %arg2: i32, %arg3: memref<1x18x18x4xbf16, #tpu.memory_space<vmem>>, %arg4: memref<36x128xbf16, #tpu.memory_space<vmem>>, %arg5: memref<1x128xf32, #tpu.memory_space<vmem>>, %arg6: memref<1x128xf32, #tpu.memory_space<vmem>>, %arg7: memref<1x4x16x128xbf16, #tpu.memory_space<vmem>>) attributes {dimension_semantics = [#tpu.dimension_semantics<parallel>, #tpu.dimension_semantics<parallel>, #tpu.dimension_semantics<parallel>], iteration_bounds = array<i64: 2, 1, 4>, scalar_prefetch = 0 : i64, scratch_operands = 0 : i64, tpu.core_type = #tpu.core_type<tc>, window_params = [{transform_indices = @transform_0, window_bounds = array<i64: 1, 18, 18, 4>}, {transform_indices = @transform_1, window_bounds = array<i64: 36, 128>}, {transform_indices = @transform_2, window_bounds = array<i64: 1, 128>}, {transform_indices = @transform_3, window_bounds = array<i64: 1, 128>}, {transform_indices = @transform_4, window_bounds = array<i64: 1, 4, 16, 128>}]} {
    %c4_i32 = arith.constant 4 : i32
    %0 = arith.muli %arg2, %c4_i32 : i32
    %c0 = arith.constant 0 : index
    %1 = arith.index_cast %0 : i32 to index
    %c0_0 = arith.constant 0 : index
    %c0_1 = arith.constant 0 : index
    %2 = vector.load %arg3[%c0, %1, %c0_0, %c0_1] : memref<1x18x18x4xbf16, #tpu.memory_space<vmem>>, vector<1x6x18x4xbf16>
    %3 = vector.shape_cast %2 : vector<1x6x18x4xbf16> to vector<6x18x4xbf16>
    %4 = vector.extract_strided_slice %3 {offsets = [0, 0, 0], sizes = [4, 18, 4], strides = [1, 1, 1]} : vector<6x18x4xbf16> to vector<4x18x4xbf16>
    %5 = vector.extract_strided_slice %4 {offsets = [0, 0, 0], sizes = [4, 16, 4], strides = [1, 1, 1]} : vector<4x18x4xbf16> to vector<4x16x4xbf16>
    %6 = vector.extract_strided_slice %4 {offsets = [0, 1, 0], sizes = [4, 16, 4], strides = [1, 1, 1]} : vector<4x18x4xbf16> to vector<4x16x4xbf16>
    %7 = vector.extract_strided_slice %4 {offsets = [0, 2, 0], sizes = [4, 16, 4], strides = [1, 1, 1]} : vector<4x18x4xbf16> to vector<4x16x4xbf16>
    %8 = vector.extract_strided_slice %3 {offsets = [1, 0, 0], sizes = [4, 18, 4], strides = [1, 1, 1]} : vector<6x18x4xbf16> to vector<4x18x4xbf16>
    %9 = vector.extract_strided_slice %8 {offsets = [0, 0, 0], sizes = [4, 16, 4], strides = [1, 1, 1]} : vector<4x18x4xbf16> to vector<4x16x4xbf16>
    %10 = vector.extract_strided_slice %8 {offsets = [0, 1, 0], sizes = [4, 16, 4], strides = [1, 1, 1]} : vector<4x18x4xbf16> to vector<4x16x4xbf16>
    %11 = vector.extract_strided_slice %8 {offsets = [0, 2, 0], sizes = [4, 16, 4], strides = [1, 1, 1]} : vector<4x18x4xbf16> to vector<4x16x4xbf16>
    %12 = vector.extract_strided_slice %3 {offsets = [2, 0, 0], sizes = [4, 18, 4], strides = [1, 1, 1]} : vector<6x18x4xbf16> to vector<4x18x4xbf16>
    %13 = vector.extract_strided_slice %12 {offsets = [0, 0, 0], sizes = [4, 16, 4], strides = [1, 1, 1]} : vector<4x18x4xbf16> to vector<4x16x4xbf16>
    %14 = vector.extract_strided_slice %12 {offsets = [0, 1, 0], sizes = [4, 16, 4], strides = [1, 1, 1]} : vector<4x18x4xbf16> to vector<4x16x4xbf16>
    %15 = vector.extract_strided_slice %12 {offsets = [0, 2, 0], sizes = [4, 16, 4], strides = [1, 1, 1]} : vector<4x18x4xbf16> to vector<4x16x4xbf16>
    %16 = tpu.concatenate %5, %6, %7, %9, %10, %11, %13, %14, %15 in 2 : vector<4x16x4xbf16>, vector<4x16x4xbf16>, vector<4x16x4xbf16>, vector<4x16x4xbf16>, vector<4x16x4xbf16>, vector<4x16x4xbf16>, vector<4x16x4xbf16>, vector<4x16x4xbf16>, vector<4x16x4xbf16> -> vector<4x16x36xbf16>
    %17 = vector.shape_cast %16 : vector<4x16x36xbf16> to vector<64x36xbf16>
    %c0_2 = arith.constant 0 : index
    %c0_3 = arith.constant 0 : index
    %18 = vector.load %arg4[%c0_2, %c0_3] : memref<36x128xbf16, #tpu.memory_space<vmem>>, vector<36x128xbf16>
    %cst = arith.constant dense<0.000000e+00> : vector<64x128xf32>
    %19 = tpu.matmul %17, %18, %cst {dimension_numbers = #tpu.dot_dimension_numbers<[1], [0], [0], [1], [0, 0, 1, 1], [], []>} : vector<64x36xbf16>, vector<36x128xbf16>, vector<64x128xf32> -> vector<64x128xf32>
    %c0_4 = arith.constant 0 : index
    %c0_5 = arith.constant 0 : index
    %20 = vector.load %arg5[%c0_4, %c0_5] : memref<1x128xf32, #tpu.memory_space<vmem>>, vector<1x128xf32>
    %21 = vector.broadcast %20 : vector<1x128xf32> to vector<64x128xf32>
    %22 = arith.mulf %19, %21 : vector<64x128xf32>
    %c0_6 = arith.constant 0 : index
    %c0_7 = arith.constant 0 : index
    %23 = vector.load %arg6[%c0_6, %c0_7] : memref<1x128xf32, #tpu.memory_space<vmem>>, vector<1x128xf32>
    %24 = vector.broadcast %23 : vector<1x128xf32> to vector<64x128xf32>
    %25 = arith.addf %22, %24 : vector<64x128xf32>
    %26 = arith.negf %25 : vector<64x128xf32>
    %27 = math.exp %26 : vector<64x128xf32>
    %cst_8 = arith.constant 1.000000e+00 : f32
    %28 = vector.broadcast %cst_8 : f32 to vector<64x128xf32>
    %29 = arith.addf %28, %27 : vector<64x128xf32>
    %30 = arith.divf %28, %29 : vector<64x128xf32>
    %31 = arith.mulf %25, %30 : vector<64x128xf32>
    %32 = vector.shape_cast %31 : vector<64x128xf32> to vector<4x16x128xf32>
    %33 = arith.truncf %32 : vector<4x16x128xf32> to vector<4x16x128xbf16>
    %c0_9 = arith.constant 0 : index
    %c0_10 = arith.constant 0 : index
    %c0_11 = arith.constant 0 : index
    %c0_12 = arith.constant 0 : index
    %34 = vector.load %arg7[%c0_9, %c0_10, %c0_11, %c0_12] : memref<1x4x16x128xbf16, #tpu.memory_space<vmem>>, vector<1x4x16x128xbf16>
    %35 = vector.shape_cast %34 : vector<1x4x16x128xbf16> to vector<4x16x128xbf16>
    %36 = vector.shape_cast %33 : vector<4x16x128xbf16> to vector<1x4x16x128xbf16>
    tpu.vector_store %arg7[%c0_9, %c0_10, %c0_11, %c0_12], %36 {strides = array<i32>} : memref<1x4x16x128xbf16, #tpu.memory_space<vmem>>, vector<1x4x16x128xbf16>,
    return
  }
  func.func @transform_0(%arg0: i32, %arg1: i32, %arg2: i32) -> (i32, i32, i32, i32) {
    %c0_i32 = arith.constant 0 : i32
    %c0_i32_0 = arith.constant 0 : i32
    %c0_i32_1 = arith.constant 0 : i32
    %c0_i32_2 = arith.constant 0 : i32
    return %arg0, %c0_i32, %c0_i32_0, %c0_i32_1 : i32, i32, i32, i32
  }
  func.func @transform_1(%arg0: i32, %arg1: i32, %arg2: i32) -> (i32, i32) {
    %c0_i32 = arith.constant 0 : i32
    %c0_i32_0 = arith.constant 0 : i32
    return %c0_i32, %arg1 : i32, i32
  }
  func.func @transform_2(%arg0: i32, %arg1: i32, %arg2: i32) -> (i32, i32) {
    %c0_i32 = arith.constant 0 : i32
    %c0_i32_0 = arith.constant 0 : i32
    return %c0_i32, %arg1 : i32, i32
  }
  func.func @transform_3(%arg0: i32, %arg1: i32, %arg2: i32) -> (i32, i32) {
    %c0_i32 = arith.constant 0 : i32
    %c0_i32_0 = arith.constant 0 : i32
    return %c0_i32, %arg1 : i32, i32
  }
  func.func @transform_4(%arg0: i32, %arg1: i32, %arg2: i32) -> (i32, i32, i32, i32) {
    %c0_i32 = arith.constant 0 : i32
    %c0_i32_0 = arith.constant 0 : i32
    return %arg0, %arg2, %c0_i32, %arg1 : i32, i32, i32, i32
  }
}

</mosaic_0001>

<llo_original>
// kernel: conv_forward.1
$region0: #{conv_forward.1}
  #allocation0 [shape = 'u32[]', space=smem, size = 0x4, offset = 0x4, fixed_abs, tag = 'smem constant byte address 0x4 - core index']
  #allocation1 [shape = 'u32[72,128]{1,0:T(1,128)}', space=vmem, size = 0x9000, scoped, tag = 'internal scratch']
  %s0 = inlined_call_operand.vmem [shape: bf16[2,18,18,4], index: 0, kind: input, shape index: {}]
  %s1 = inlined_call_operand.vmem [shape: bf16[36,128], index: 1, kind: input, shape index: {}]
  %s2 = inlined_call_operand.vmem [shape: f32[1,128], index: 2, kind: input, shape index: {}]
  %s3 = inlined_call_operand.vmem [shape: f32[1,128], index: 3, kind: input, shape index: {}]
  %s4 = inlined_call_operand.vmem [shape: bf16[2,16,16,128], index: 4, kind: output, shape index: {}]
  %s5 = sld [smem:[#allocation0]]
  $region49: #{conv_forward.1} parent=0
    _
  %s7 = ssub.s32 1, %s5
  %s8 = scalar_select 0, %s7, %s5
  loop: start=0, step=1, limit=10
  $region2: #{conv_forward.1} parent=0 // loop_pre_header
    _
  $region3: #{conv_forward.1} parent=0 // loop_header
    %s10 = sphi 0, %s14
    %p11 = scmp.ge.s32.totalorder %s10, 10
    %s17 = sphi 0, %s36
    %s18 = sphi 0, %s32
    %s19 = sphi 0, %s28
    %s20 = sphi 0, %s17
    %s21 = sphi 0, %s18
    %s22 = sphi 0, %s19
    %s23 = sphi 0, %s20
    %s24 = sphi 0, %s21
    %s25 = sphi 0, %s22
    %s39 = sphi 0, %s41
    %s42 = sphi 0, %s39
    %s43 = sphi 0, %s42
    %s59 = sphi 0, %s43
    %s65 = sphi 0, %s67
    %s68 = sphi 0, %s65
    %s69 = sphi 0, %s68
    %s85 = sphi 0, %s69
    %s91 = sphi 0, %s93
    %s94 = sphi 0, %s91
    %s95 = sphi 0, %s94
    %s111 = sphi 0, %s95
    %s117 = sphi 0, %s119
    %s120 = sphi 0, %s117
    %s121 = sphi 0, %s120
    %s137 = sphi 0, %s121
    %s147 = sphi 0, %s149
    %s150 = sphi 0, %s147
    %s151 = sphi 0, %s150
    %s167 = sphi 0, %s151
  $region4: #{conv_forward.1} parent=0 // loop_header_branch
    %13 = sbr.rel (%p11) target = $region8
  $region5: #{conv_forward.1} parent=0 // loop_body
    %s15 = ssub.s32 %s10, 1
    %s16 = ssub.s32 %s10, 2
    %s26 = sadd.s32 1, %s19
    %p27 = scmp.ge.s32.totalorder %s26, 4
    %s28 = scalar_select %p27, 0, %s26
    %s29 = sadd.s32 1, %s18
    %s30 = scalar_select %p27, %s29, %s18
    %p31 = scmp.ge.s32.totalorder %s30, 1
    %s32 = scalar_select %p31, 0, %s30
    %s33 = sadd.s32 1, %s17
    %s34 = scalar_select %p31, %s33, %s17
    %p35 = scmp.ge.s32.totalorder %s34, 2
    %s36 = scalar_select %p35, 0, %s34
    %s37 = ssub.s32 %s17, %s36
    %p38 = scmp.eq.s32.totalorder %s37, 0
    %s40 = sadd.s32 %s39, 1
    %s41 = scalar_select %p38, %s39, %s40
    %p44 = pneg %p38
    %p45 = scmp.eq.s32.totalorder %s10, 7
    %p46 = por %p44, %p45
    %p47 = scmp.ne.s32.totalorder %s39, %s42
    %p48 = scmp.eq.s32.totalorder %s10, 0
    %p49 = por %p47, %p48
    %p50 = scmp.ne.s32.totalorder %s39, %s42
    %p51 = scmp.eq.s32.totalorder %s15, 7
    %p52 = por %p50, %p51
    %p53 = scmp.ne.s32.totalorder %s42, %s43
    %p54 = scmp.eq.s32.totalorder %s15, 0
    %p55 = por %p53, %p54
    %p56 = scmp.ne.s32.totalorder %s42, %s43
    %p57 = scmp.eq.s32.totalorder %s16, 7
    %p58 = por %p56, %p57
    %p60 = scmp.ne.s32.totalorder %s43, %s59
    %p61 = scmp.eq.s32.totalorder %s16, 0
    %p62 = por %p60, %p61
    %s63 = ssub.s32 %s18, %s32
    %p64 = scmp.eq.s32.totalorder %s63, 0
    %s66 = sadd.s32 %s65, 1
    %s67 = scalar_select %p64, %s65, %s66
    %p70 = pneg %p64
    %p71 = scmp.eq.s32.totalorder %s10, 7
    %p72 = por %p70, %p71
    %p73 = scmp.ne.s32.totalorder %s65, %s68
    %p74 = scmp.eq.s32.totalorder %s10, 0
    %p75 = por %p73, %p74
    %p76 = scmp.ne.s32.totalorder %s65, %s68
    %p77 = scmp.eq.s32.totalorder %s15, 7
    %p78 = por %p76, %p77
    %p79 = scmp.ne.s32.totalorder %s68, %s69
    %p80 = scmp.eq.s32.totalorder %s15, 0
    %p81 = por %p79, %p80
    %p82 = scmp.ne.s32.totalorder %s68, %s69
    %p83 = scmp.eq.s32.totalorder %s16, 7
    %p84 = por %p82, %p83
    %p86 = scmp.ne.s32.totalorder %s69, %s85
    %p87 = scmp.eq.s32.totalorder %s16, 0
    %p88 = por %p86, %p87
    %s89 = ssub.s32 %s18, %s32
    %p90 = scmp.eq.s32.totalorder %s89, 0
    %s92 = sadd.s32 %s91, 1
    %s93 = scalar_select %p90, %s91, %s92
    %p96 = pneg %p90
    %p97 = scmp.eq.s32.totalorder %s10, 7
    %p98 = por %p96, %p97
    %p99 = scmp.ne.s32.totalorder %s91, %s94
    %p100 = scmp.eq.s32.totalorder %s10, 0
    %p101 = por %p99, %p100
    %p102 = scmp.ne.s32.totalorder %s91, %s94
    %p103 = scmp.eq.s32.totalorder %s15, 7
    %p104 = por %p102, %p103
    %p105 = scmp.ne.s32.totalorder %s94, %s95
    %p106 = scmp.eq.s32.totalorder %s15, 0
    %p107 = por %p105, %p106
    %p108 = scmp.ne.s32.totalorder %s94, %s95
    %p109 = scmp.eq.s32.totalorder %s16, 7
    %p110 = por %p108, %p109
    %p112 = scmp.ne.s32.totalorder %s95, %s111
    %p113 = scmp.eq.s32.totalorder %s16, 0
    %p114 = por %p112, %p113
    %s115 = ssub.s32 %s18, %s32
    %p116 = scmp.eq.s32.totalorder %s115, 0
    %s118 = sadd.s32 %s117, 1
    %s119 = scalar_select %p116, %s117, %s118
    %p122 = pneg %p116
    %p123 = scmp.eq.s32.totalorder %s10, 7
    %p124 = por %p122, %p123
    %p125 = scmp.ne.s32.totalorder %s117, %s120
    %p126 = scmp.eq.s32.totalorder %s10, 0
    %p127 = por %p125, %p126
    %p128 = scmp.ne.s32.totalorder %s117, %s120
    %p129 = scmp.eq.s32.totalorder %s15, 7
    %p130 = por %p128, %p129
    %p131 = scmp.ne.s32.totalorder %s120, %s121
    %p132 = scmp.eq.s32.totalorder %s15, 0
    %p133 = por %p131, %p132
    %p134 = scmp.ne.s32.totalorder %s120, %s121
    %p135 = scmp.eq.s32.totalorder %s16, 7
    %p136 = por %p134, %p135
    %p138 = scmp.ne.s32.totalorder %s121, %s137
    %p139 = scmp.eq.s32.totalorder %s16, 0
    %p140 = por %p138, %p139
    %s141 = ssub.s32 %s17, %s36
    %s142 = ssub.s32 %s19, %s28
    %s143 = sor.u32 %s141, %s142
    %s144 = ssub.s32 %s18, %s32
    %s145 = sor.u32 %s143, %s144
    %p146 = scmp.eq.s32.totalorder %s145, 0
    %s148 = sadd.s32 %s147, 1
    %s149 = scalar_select %p146, %s147, %s148
    %p152 = pneg %p146
    %p153 = scmp.eq.s32.totalorder %s10, 7
    %p154 = por %p152, %p153
    %p155 = scmp.ne.s32.totalorder %s147, %s150
    %p156 = scmp.eq.s32.totalorder %s10, 0
    %p157 = por %p155, %p156
    %p158 = scmp.ne.s32.totalorder %s147, %s150
    %p159 = scmp.eq.s32.totalorder %s15, 7
    %p160 = por %p158, %p159
    %p161 = scmp.ne.s32.totalorder %s150, %s151
    %p162 = scmp.eq.s32.totalorder %s15, 0
    %p163 = por %p161, %p162
    %p164 = scmp.ne.s32.totalorder %s150, %s151
    %p165 = scmp.eq.s32.totalorder %s16, 7
    %p166 = por %p164, %p165
    %p168 = scmp.ne.s32.totalorder %s151, %s167
    %p169 = scmp.eq.s32.totalorder %s16, 0
    %p170 = por %p168, %p169
    %p171 = scmp.le.s32.totalorder 1, %s10
    %p172 = scmp.lt.s32.totalorder %s10, 9
    %p173 = pnand %p171, %p172
    %p174 = pneg %p173
    // Predicated region
    $region9: #{conv_forward.1} parent=5 // pred_check
      _
    $region10: #{conv_forward.1} parent=5 // pred_check_branch
      %176 = sbr.rel (%p173) target = $region12
    $region11: #{conv_forward.1} parent=5 // pred_region
      %s177 = ssub.s32 %s10, 1
      // Predicated region
      $region13: #{conv_forward.1} parent=11 // pred_check
        %p178 = pneg %p81
      $region14: #{conv_forward.1} parent=11 // pred_check_branch
        %180 = sbr.rel (%p178) target = $region16
      $region15: #{conv_forward.1} parent=11 // pred_region
        %p181 = scmp.lt.s32.totalorder %s21, 0
        %s182 = scalar_select %p181, %s21, 0
        %s183 = smul.addr %s182, 4
        %s184 = scalar_lea.vmem %s1, %s183
      $region16: #{conv_forward.1} parent=11 // pred_fallthru
        _
      // Predicated region
      $region17: #{conv_forward.1} parent=11 // pred_check
        %p185 = pneg %p107
      $region18: #{conv_forward.1} parent=11 // pred_check_branch
        %187 = sbr.rel (%p185) target = $region20
      $region19: #{conv_forward.1} parent=11 // pred_region
        %p188 = scmp.lt.s32.totalorder %s21, 0
        %s189 = scalar_select %p188, %s21, 0
        %s190 = scalar_lea.vmem %s2, %s189
      $region20: #{conv_forward.1} parent=11 // pred_fallthru
        _
      // Predicated region
      $region21: #{conv_forward.1} parent=11 // pred_check
        %p191 = pneg %p133
      $region22: #{conv_forward.1} parent=11 // pred_check_branch
        %193 = sbr.rel (%p191) target = $region24
      $region23: #{conv_forward.1} parent=11 // pred_region
        %p194 = scmp.lt.s32.totalorder %s21, 0
        %s195 = scalar_select %p194, %s21, 0
        %s196 = scalar_lea.vmem %s3, %s195
      $region24: #{conv_forward.1} parent=11 // pred_fallthru
        _
    $region12: #{conv_forward.1} parent=5 // pred_fallthru
      _
    %p197 = scmp.lt.s32.totalorder %s10, 8
    // Predicated region
    $region25: #{conv_forward.1} parent=5 // pred_check
      %p198 = pneg %p197
    $region26: #{conv_forward.1} parent=5 // pred_check_branch
      %200 = sbr.rel (%p198) target = $region28
    $region27: #{conv_forward.1} parent=5 // pred_region
      // Predicated region
      $region29: #{conv_forward.1} parent=27 // pred_check
        %p201 = pneg %p49
      $region30: #{conv_forward.1} parent=27 // pred_check_branch
        %203 = sbr.rel (%p201) target = $region32
      $region31: #{conv_forward.1} parent=27 // pred_region
        %p204 = scmp.lt.s32.totalorder %s17, 1
        %s205 = scalar_select %p204, %s17, 1
        %s206 = smul.addr %s205, 54
        %s207 = smul.addr %s206, 4
        %s208 = scalar_lea.vmem %s0, %s207
      $region32: #{conv_forward.1} parent=27 // pred_fallthru
        _
    $region28: #{conv_forward.1} parent=5 // pred_fallthru
      _
    %p209 = scmp.le.s32.totalorder 1, %s10
    %p210 = scmp.lt.s32.totalorder %s10, 9
    %p211 = pnand %p209, %p210
    %p212 = pneg %p211
    // Predicated region
    $region33: #{conv_forward.1} parent=5 // pred_check
      _
    $region34: #{conv_forward.1} parent=5 // pred_check_branch
      %214 = sbr.rel (%p211) target = $region36
    $region35: #{conv_forward.1} parent=5 // pred_region
      %s215 = ssub.s32 %s10, 1
      %p216 = scmp.lt.s32.totalorder %s20, 1
      %s217 = scalar_select %p216, %s20, 1
      %s218 = smul.addr %s217, 54
      %s219 = smul.addr %s218, 4
      %s220 = scalar_lea.vmem %s0, %s219
      %p221 = pneg %p55
      %p222 = pneg %p52
      %p223 = scmp.lt.s32.totalorder %s21, 0
      %s224 = scalar_select %p223, %s21, 0
      %s225 = smul.addr %s224, 4
      %s226 = scalar_lea.vmem %s1, %s225
      %p227 = pneg %p81
      %p228 = pneg %p78
      %p229 = scmp.lt.s32.totalorder %s21, 0
      %s230 = scalar_select %p229, %s21, 0
      %s231 = scalar_lea.vmem %s2, %s230
      %p232 = pneg %p107
      %p233 = pneg %p104
      %p234 = scmp.lt.s32.totalorder %s21, 0
      %s235 = scalar_select %p234, %s21, 0
      %s236 = scalar_lea.vmem %s3, %s235
      %p237 = pneg %p133
      %p238 = pneg %p130
      %p239 = pneg %p163
      %p240 = pneg %p160
      %s241 = smul.u32 4, %s22
      %p242 = scmp.lt.s32.totalorder %s20, 1
      %s243 = scalar_select %p242, %s20, 1
      %p244 = scmp.lt.s32.totalorder %s241, 15
      %s245 = scalar_select %p244, %s241, 15
      %p246 = scmp.lt.s32.totalorder %s21, 0
      %s247 = scalar_select %p246, %s21, 0
      %s248 = smul.addr %s245, 2
      %s249 = sadd.s32 %s247, %s248
      %s250 = smul.addr %s243, 32
      %s251 = sadd.s32 %s249, %s250
      %s252 = smul.addr %s251, 4
      %s253 = scalar_lea.vmem %s4, %s252
      %p254 = scmp.lt.s32.totalorder %s20, 1
      %s255 = scalar_select %p254, %s20, 1
      %s256 = smul.addr %s255, 54
      %s257 = smul.addr %s256, 4
      %s258 = scalar_lea.vmem %s0, %s257
      %p259 = scmp.lt.s32.totalorder %s21, 0
      %s260 = scalar_select %p259, %s21, 0
      %s261 = smul.addr %s260, 4
      %s262 = scalar_lea.vmem %s1, %s261
      %p263 = scmp.lt.s32.totalorder %s21, 0
      %s264 = scalar_select %p263, %s21, 0
      %s265 = scalar_lea.vmem %s2, %s264
      %p266 = scmp.lt.s32.totalorder %s21, 0
      %s267 = scalar_select %p266, %s21, 0
      %s268 = scalar_lea.vmem %s3, %s267
      %s269 = smul.u32 4, %s22
      %p270 = scmp.lt.s32.totalorder %s20, 1
      %s271 = scalar_select %p270, %s20, 1
      %p272 = scmp.lt.s32.totalorder %s269, 15
      %s273 = scalar_select %p272, %s269, 15
      %p274 = scmp.lt.s32.totalorder %s21, 0
      %s275 = scalar_select %p274, %s21, 0
      %s276 = smul.addr %s273, 2
      %s277 = sadd.s32 %s275, %s276
      %s278 = smul.addr %s271, 32
      %s279 = sadd.s32 %s277, %s278
      %s280 = smul.addr %s279, 4
      %s281 = scalar_lea.vmem %s4, %s280
      %s282 = smul.u32 4, %s22
      %s284 = smul.u32 %s22, 4
      %s285 = smul.u32 %s284, 3
      %s286 = smul.addr %s285, 4
      %s287 = scalar_lea.vmem %s258, %s286
      %v288 = vld [vmem:[%s287] sm:$0xf]
      %v289 = vld [vmem:[%s287 + $0x4] sm:$0xf]
      %v290 = vld [vmem:[%s287 + $0x8] sm:$0x1]
      %v291 = vld [vmem:[%s287 + $0xc] sm:$0xf]
      %v292 = vld [vmem:[%s287 + $0x10] sm:$0xf]
      %v293 = vld [vmem:[%s287 + $0x14] sm:$0x1]
      %v294 = vld [vmem:[%s287 + $0x18] sm:$0xf]
      %v295 = vld [vmem:[%s287 + $0x1c] sm:$0xf]
      %v296 = vld [vmem:[%s287 + $0x20] sm:$0x1]
      %v297 = vld [vmem:[%s287 + $0x24] sm:$0xf]
      %v298 = vld [vmem:[%s287 + $0x28] sm:$0xf]
      %v299 = vld [vmem:[%s287 + $0x2c] sm:$0x1]
      %v300 = vld [vmem:[%s287 + $0x30] sm:$0xf]
      %v301 = vld [vmem:[%s287 + $0x34] sm:$0xf]
      %v302 = vld [vmem:[%s287 + $0x38] sm:$0x1]
      %v303 = vld [vmem:[%s287 + $0x3c] sm:$0xf]
      %v304 = vld [vmem:[%s287 + $0x40] sm:$0xf]
      %v305 = vld [vmem:[%s287 + $0x44] sm:$0x1]
      %v314 = vunpack.c.l.b16 %v288
      %v315 = vunpack.c.l.b16 %v289
      %v316 = vunpack.c.l.b16 %v291
      %v317 = vunpack.c.l.b16 %v292
      %v318 = vunpack.c.l.b16 %v294
      %v319 = vunpack.c.l.b16 %v295
      %v320 = vunpack.c.l.b16 %v297
      %v321 = vunpack.c.l.b16 %v298
      %v322 = vpack.c.b16 %v315, %v314
      %v323 = vpack.c.b16 %v317, %v316
      %v324 = vpack.c.b16 %v319, %v318
      %v325 = vpack.c.b16 %v321, %v320
      %v330 = vunpack.c.l.b16 %v290
      %v331 = vunpack.c.l.b16 %v293
      %v332 = vunpack.c.l.b16 %v296
      %v333 = vunpack.c.l.b16 %v299
      %v334 = vpack.c.b16 %v330, %v330
      %v335 = vpack.c.b16 %v331, %v331
      %v336 = vpack.c.b16 %v332, %v332
      %v337 = vpack.c.b16 %v333, %v333
      %vm338 = vsmask.f32 7424
      %v340 = vshrl.u32 %v322, 16
      %v342 = vshll.u32 %v322, 16
      %v344 = vrot.slane %v342, 1
      %v345 = vor.u32 %v340, %v344
      %v347 = vshll.u32 %v334, 16
      %v349 = vrot.slane %v347, 1
      %v350 = vsel %vm338, %v345, %v349
      %v352 = vshrl.u32 %v323, 16
      %v354 = vshll.u32 %v323, 16
      %v356 = vrot.slane %v354, 1
      %v357 = vor.u32 %v352, %v356
      %v359 = vshll.u32 %v335, 16
      %v361 = vrot.slane %v359, 1
      %v362 = vsel %vm338, %v357, %v361
      %v364 = vshrl.u32 %v324, 16
      %v366 = vshll.u32 %v324, 16
      %v368 = vrot.slane %v366, 1
      %v369 = vor.u32 %v364, %v368
      %v371 = vshll.u32 %v336, 16
      %v373 = vrot.slane %v371, 1
      %v374 = vsel %vm338, %v369, %v373
      %v376 = vshrl.u32 %v325, 16
      %v378 = vshll.u32 %v325, 16
      %v380 = vrot.slane %v378, 1
      %v381 = vor.u32 %v376, %v380
      %v383 = vshll.u32 %v337, 16
      %v385 = vrot.slane %v383, 1
      %v386 = vsel %vm338, %v381, %v385
      %387 = vrot.lane.b32.xlu0 %v350, 4
      %v388 = vpop.permute.xlu0 %387
      %389 = vrot.lane.b32.xlu0 %v362, 4
      %v390 = vpop.permute.xlu0 %389
      %391 = vrot.lane.b32.xlu0 %v374, 4
      %v392 = vpop.permute.xlu0 %391
      %393 = vrot.lane.b32.xlu0 %v386, 4
      %v394 = vpop.permute.xlu0 %393
      %vm395 = vcmask 1046528
      %v396 = vrot.slane %v322, 1
      %v397 = vrot.slane %v334, 1
      %v398 = vsel %vm395, %v396, %v397
      %v399 = vrot.slane %v323, 1
      %v400 = vrot.slane %v335, 1
      %v401 = vsel %vm395, %v399, %v400
      %v402 = vrot.slane %v324, 1
      %v403 = vrot.slane %v336, 1
      %v404 = vsel %vm395, %v402, %v403
      %v405 = vrot.slane %v325, 1
      %v406 = vrot.slane %v337, 1
      %v407 = vsel %vm395, %v405, %v406
      %408 = vrot.lane.b32.xlu0 %v398, 8
      %v409 = vpop.permute.xlu0 %408
      %410 = vrot.lane.b32.xlu0 %v401, 8
      %v411 = vpop.permute.xlu0 %410
      %412 = vrot.lane.b32.xlu0 %v404, 8
      %v413 = vpop.permute.xlu0 %412
      %414 = vrot.lane.b32.xlu0 %v407, 8
      %v415 = vpop.permute.xlu0 %414
      %v418 = vunpack.c.l.b16 %v300
      %v419 = vunpack.c.l.b16 %v301
      %v420 = vpack.c.b16 %v419, %v418
      %421 = vrot.lane.b32.xlu0 %v323, 12
      %v422 = vpop.permute.xlu0 %421
      %423 = vrot.lane.b32.xlu0 %v324, 12
      %v424 = vpop.permute.xlu0 %423
      %425 = vrot.lane.b32.xlu0 %v325, 12
      %v426 = vpop.permute.xlu0 %425
      %427 = vrot.lane.b32.xlu0 %v420, 12
      %v428 = vpop.permute.xlu0 %427
      %v430 = vunpack.c.l.b16 %v302
      %v431 = vpack.c.b16 %v430, %v430
      %v433 = vshrl.u32 %v420, 16
      %v435 = vshll.u32 %v420, 16
      %v437 = vrot.slane %v435, 1
      %v438 = vor.u32 %v433, %v437
      %v440 = vshll.u32 %v431, 16
      %v442 = vrot.slane %v440, 1
      %v443 = vsel %vm338, %v438, %v442
      %444 = vrot.lane.b32.xlu0 %v362, 16
      %v445 = vpop.permute.xlu0 %444
      %446 = vrot.lane.b32.xlu0 %v374, 16
      %v447 = vpop.permute.xlu0 %446
      %448 = vrot.lane.b32.xlu0 %v386, 16
      %v449 = vpop.permute.xlu0 %448
      %450 = vrot.lane.b32.xlu0 %v443, 16
      %v451 = vpop.permute.xlu0 %450
      %v452 = vrot.slane %v420, 1
      %v453 = vrot.slane %v431, 1
      %v454 = vsel %vm395, %v452, %v453
      %455 = vrot.lane.b32.xlu0 %v401, 20
      %v456 = vpop.permute.xlu0 %455
      %457 = vrot.lane.b32.xlu0 %v404, 20
      %v458 = vpop.permute.xlu0 %457
      %459 = vrot.lane.b32.xlu0 %v407, 20
      %v460 = vpop.permute.xlu0 %459
      %461 = vrot.lane.b32.xlu0 %v454, 20
      %v462 = vpop.permute.xlu0 %461
      %v465 = vunpack.c.l.b16 %v303
      %v466 = vunpack.c.l.b16 %v304
      %v467 = vpack.c.b16 %v466, %v465
      %468 = vrot.lane.b32.xlu0 %v324, 24
      %v469 = vpop.permute.xlu0 %468
      %470 = vrot.lane.b32.xlu0 %v325, 24
      %v471 = vpop.permute.xlu0 %470
      %472 = vrot.lane.b32.xlu0 %v420, 24
      %v473 = vpop.permute.xlu0 %472
      %474 = vrot.lane.b32.xlu0 %v467, 24
      %v475 = vpop.permute.xlu0 %474
      %v477 = vunpack.c.l.b16 %v305
      %v478 = vpack.c.b16 %v477, %v477
      %v480 = vshrl.u32 %v467, 16
      %v482 = vshll.u32 %v467, 16
      %v484 = vrot.slane %v482, 1
      %v485 = vor.u32 %v480, %v484
      %v487 = vshll.u32 %v478, 16
      %v489 = vrot.slane %v487, 1
      %v490 = vsel %vm338, %v485, %v489
      %491 = vrot.lane.b32.xlu0 %v374, 28
      %v492 = vpop.permute.xlu0 %491
      %493 = vrot.lane.b32.xlu0 %v386, 28
      %v494 = vpop.permute.xlu0 %493
      %495 = vrot.lane.b32.xlu0 %v443, 28
      %v496 = vpop.permute.xlu0 %495
      %497 = vrot.lane.b32.xlu0 %v490, 28
      %v498 = vpop.permute.xlu0 %497
      %v499 = vrot.slane %v467, 1
      %v500 = vrot.slane %v478, 1
      %v501 = vsel %vm395, %v499, %v500
      %502 = vrot.lane.b32.xlu0 %v404, 32
      %v503 = vpop.permute.xlu0 %502
      %504 = vrot.lane.b32.xlu0 %v407, 32
      %v505 = vpop.permute.xlu0 %504
      %506 = vrot.lane.b32.xlu0 %v454, 32
      %v507 = vpop.permute.xlu0 %506
      %508 = vrot.lane.b32.xlu0 %v501, 32
      %v509 = vpop.permute.xlu0 %508
      %vm510 = vcmask 31744
      %v512 = vsel %vm510, %v322, %v388
      %v514 = vsel %vm510, %v323, %v390
      %v516 = vsel %vm510, %v324, %v392
      %v518 = vsel %vm510, %v325, %v394
      %vm519 = vcmask 64512
      %v521 = vsel %vm519, %v512, %v409
      %v523 = vsel %vm519, %v514, %v411
      %v525 = vsel %vm519, %v516, %v413
      %v527 = vsel %vm519, %v518, %v415
      %vm528 = vcmask 97280
      %v530 = vsel %vm528, %v521, %v422
      %v532 = vsel %vm528, %v523, %v424
      %v534 = vsel %vm528, %v525, %v426
      %v536 = vsel %vm528, %v527, %v428
      %vm537 = vcmask 130048
      %v539 = vsel %vm537, %v530, %v445
      %v541 = vsel %vm537, %v532, %v447
      %v543 = vsel %vm537, %v534, %v449
      %v545 = vsel %vm537, %v536, %v451
      %vm546 = vcmask 162816
      %v548 = vsel %vm546, %v539, %v456
      %v550 = vsel %vm546, %v541, %v458
      %v552 = vsel %vm546, %v543, %v460
      %v554 = vsel %vm546, %v545, %v462
      %vm555 = vcmask 195584
      %v557 = vsel %vm555, %v548, %v469
      %v559 = vsel %vm555, %v550, %v471
      %v561 = vsel %vm555, %v552, %v473
      %v563 = vsel %vm555, %v554, %v475
      %vm564 = vcmask 228352
      %v566 = vsel %vm564, %v557, %v492
      %v568 = vsel %vm564, %v559, %v494
      %v570 = vsel %vm564, %v561, %v496
      %v572 = vsel %vm564, %v563, %v498
      %vm573 = vcmask 261120
      %v575 = vsel %vm573, %v566, %v503
      %v577 = vsel %vm573, %v568, %v505
      %v579 = vsel %vm573, %v570, %v507
      %v581 = vsel %vm573, %v572, %v509
      %v582 = vld [vmem:[%s262] sm:$0xf]
      %v583 = vld [vmem:[%s262 + $0x4] sm:$0xf]
      %v584 = vld [vmem:[%s262 + $0x8] sm:$0xf]
      %v585 = vld [vmem:[%s262 + $0xc] sm:$0xf]
      %v586 = vld [vmem:[%s262 + $0x10] sm:$0x3]
      %v592 = vunpack.c.l.b16 %v582
      %v593 = vunpack.c.l.b16 %v583
      %v594 = vunpack.c.l.b16 %v584
      %v595 = vunpack.c.l.b16 %v585
      %v596 = vunpack.c.l.b16 %v586
      %v597 = vpack.c.b16 %v593, %v592
      %v598 = vpack.c.b16 %v595, %v594
      %v599 = vpack.c.b16 %v596, %v596
      %vm602 = vcmask 293888
      %v603 = vsel %vm602, %v575, 0
      %v605 = vsel %vm602, %v577, 0
      %v607 = vsel %vm602, %v579, 0
      %v609 = vsel %vm602, %v581, 0
      %vm611 = vcmask 1041408
      %v613 = vsel %vm611, %v599, 0
      %615 = vmatpush.bf16.msra.mxu0 0
      %616 = vmatpush.bf16.msra.mxu0 0
      %617 = vmatpush.bf16.msra.mxu0 0
      %618 = vmatpush.bf16.msra.mxu0 0
      %619 = vmatpush.bf16.msra.mxu0 0
      %620 = vmatpush.bf16.msra.mxu0 %v613
      %621 = vmatpush.bf16.msra.mxu0 %v598
      %622 = vmatpush.bf16.msra.mxu0 %v597
      %623 = vmatmul.bf16.gmra.mxu0 %v603
      %v624 = vpop.f32.mrf.mxu0
      %v625 = vadd.f32 0.0, %v624
      %v626 = vpop.f32.mrf.mxu0
      %v627 = vadd.f32 0.0, %v626
      %628 = vmatmul.bf16.gmra.mxu0 %v605
      %v629 = vpop.f32.mrf.mxu0
      %v630 = vadd.f32 0.0, %v629
      %v631 = vpop.f32.mrf.mxu0
      %v632 = vadd.f32 0.0, %v631
      %633 = vmatmul.bf16.gmra.mxu0 %v607
      %v634 = vpop.f32.mrf.mxu0
      %v635 = vadd.f32 0.0, %v634
      %v636 = vpop.f32.mrf.mxu0
      %v637 = vadd.f32 0.0, %v636
      %638 = vmatmul.bf16.gmra.mxu0 %v609
      %v639 = vpop.f32.mrf.mxu0
      %v640 = vadd.f32 0.0, %v639
      %v641 = vpop.f32.mrf.mxu0
      %v642 = vadd.f32 0.0, %v641
      %643 = vdwg.mxu0
      %v644 = vld [vmem:[%s265] sm:$0x1]
      %v646 = vperm.slane %v644, 0
      %v648 = vmul.f32 %v625, %v646
      %v649 = vmul.f32 %v627, %v646
      %v650 = vmul.f32 %v630, %v646
      %v651 = vmul.f32 %v632, %v646
      %v652 = vmul.f32 %v635, %v646
      %v653 = vmul.f32 %v637, %v646
      %v654 = vmul.f32 %v640, %v646
      %v655 = vmul.f32 %v642, %v646
      %v656 = vld [vmem:[%s268] sm:$0x1]
      %v658 = vperm.slane %v656, 0
      %v660 = vadd.f32 %v648, %v658
      %v661 = vadd.f32 %v649, %v658
      %v662 = vadd.f32 %v650, %v658
      %v663 = vadd.f32 %v651, %v658
      %v664 = vadd.f32 %v652, %v658
      %v665 = vadd.f32 %v653, %v658
      %v666 = vadd.f32 %v654, %v658
      %v667 = vadd.f32 %v655, %v658
      %v668 = vxor.u32 %v660, 2147483648
      %v669 = vxor.u32 %v661, 2147483648
      %v670 = vxor.u32 %v662, 2147483648
      %v671 = vxor.u32 %v663, 2147483648
      %v672 = vxor.u32 %v664, 2147483648
      %v673 = vxor.u32 %v665, 2147483648
      %v674 = vxor.u32 %v666, 2147483648
      %v675 = vxor.u32 %v667, 2147483648
      %v676 = vmul.f32 %v668, 1.442695
      %v677 = vpow.pop %v676
      %v678 = vmul.f32 %v669, 1.442695
      %v679 = vpow.pop %v678
      %v680 = vmul.f32 %v670, 1.442695
      %v681 = vpow.pop %v680
      %v682 = vmul.f32 %v671, 1.442695
      %v683 = vpow.pop %v682
      %v684 = vmul.f32 %v672, 1.442695
      %v685 = vpow.pop %v684
      %v686 = vmul.f32 %v673, 1.442695
      %v687 = vpow.pop %v686
      %v688 = vmul.f32 %v674, 1.442695
      %v689 = vpow.pop %v688
      %v690 = vmul.f32 %v675, 1.442695
      %v691 = vpow.pop %v690
      %v692 = vadd.f32 %v677, 1.0
      %v693 = vadd.f32 %v679, 1.0
      %v694 = vadd.f32 %v681, 1.0
      %v695 = vadd.f32 %v683, 1.0
      %v696 = vadd.f32 %v685, 1.0
      %v697 = vadd.f32 %v687, 1.0
      %v698 = vadd.f32 %v689, 1.0
      %v699 = vadd.f32 %v691, 1.0
      %v700 = vrcp.pop %v692
      %v701 = vmul.f32 %v692, %v700
      %v702 = vsub.f32 1.0, %v701
      %v703 = vmul.f32 %v700, %v702
      %v704 = vadd.f32 %v700, %v703
      %vm705 = vweird.f32 %v692
      %vm706 = vweird.f32 %v700
      %vm707 = vmor %vm705, %vm706
      %v708 = vsel %vm707, %v700, %v704
      %v709 = vand.u32 2147483647, %v692
      %vm710 = vcmp.eq.f32.partialorder %v709, 8.507059e+37
      %v711 = vand.u32 %v692, 2147483648
      %v712 = vor.u32 1.1754944e-38, %v711
      %v713 = vsel %vm710, %v712, %v708
      %v714 = vmul.f32 1.0, %v713
      %v715 = vrcp.pop %v693
      %v716 = vmul.f32 %v693, %v715
      %v717 = vsub.f32 1.0, %v716
      %v718 = vmul.f32 %v715, %v717
      %v719 = vadd.f32 %v715, %v718
      %vm720 = vweird.f32 %v693
      %vm721 = vweird.f32 %v715
      %vm722 = vmor %vm720, %vm721
      %v723 = vsel %vm722, %v715, %v719
      %v724 = vand.u32 2147483647, %v693
      %vm725 = vcmp.eq.f32.partialorder %v724, 8.507059e+37
      %v726 = vand.u32 %v693, 2147483648
      %v727 = vor.u32 1.1754944e-38, %v726
      %v728 = vsel %vm725, %v727, %v723
      %v729 = vmul.f32 1.0, %v728
      %v730 = vrcp.pop %v694
      %v731 = vmul.f32 %v694, %v730
      %v732 = vsub.f32 1.0, %v731
      %v733 = vmul.f32 %v730, %v732
      %v734 = vadd.f32 %v730, %v733
      %vm735 = vweird.f32 %v694
      %vm736 = vweird.f32 %v730
      %vm737 = vmor %vm735, %vm736
      %v738 = vsel %vm737, %v730, %v734
      %v739 = vand.u32 2147483647, %v694
      %vm740 = vcmp.eq.f32.partialorder %v739, 8.507059e+37
      %v741 = vand.u32 %v694, 2147483648
      %v742 = vor.u32 1.1754944e-38, %v741
      %v743 = vsel %vm740, %v742, %v738
      %v744 = vmul.f32 1.0, %v743
      %v745 = vrcp.pop %v695
      %v746 = vmul.f32 %v695, %v745
      %v747 = vsub.f32 1.0, %v746
      %v748 = vmul.f32 %v745, %v747
      %v749 = vadd.f32 %v745, %v748
      %vm750 = vweird.f32 %v695
      %vm751 = vweird.f32 %v745
      %vm752 = vmor %vm750, %vm751
      %v753 = vsel %vm752, %v745, %v749
      %v754 = vand.u32 2147483647, %v695
      %vm755 = vcmp.eq.f32.partialorder %v754, 8.507059e+37
      %v756 = vand.u32 %v695, 2147483648
      %v757 = vor.u32 1.1754944e-38, %v756
      %v758 = vsel %vm755, %v757, %v753
      %v759 = vmul.f32 1.0, %v758
      %v760 = vrcp.pop %v696
      %v761 = vmul.f32 %v696, %v760
      %v762 = vsub.f32 1.0, %v761
      %v763 = vmul.f32 %v760, %v762
      %v764 = vadd.f32 %v760, %v763
      %vm765 = vweird.f32 %v696
      %vm766 = vweird.f32 %v760
      %vm767 = vmor %vm765, %vm766
      %v768 = vsel %vm767, %v760, %v764
      %v769 = vand.u32 2147483647, %v696
      %vm770 = vcmp.eq.f32.partialorder %v769, 8.507059e+37
      %v771 = vand.u32 %v696, 2147483648
      %v772 = vor.u32 1.1754944e-38, %v771
      %v773 = vsel %vm770, %v772, %v768
      %v774 = vmul.f32 1.0, %v773
      %v775 = vrcp.pop %v697
      %v776 = vmul.f32 %v697, %v775
      %v777 = vsub.f32 1.0, %v776
      %v778 = vmul.f32 %v775, %v777
      %v779 = vadd.f32 %v775, %v778
      %vm780 = vweird.f32 %v697
      %vm781 = vweird.f32 %v775
      %vm782 = vmor %vm780, %vm781
      %v783 = vsel %vm782, %v775, %v779
      %v784 = vand.u32 2147483647, %v697
      %vm785 = vcmp.eq.f32.partialorder %v784, 8.507059e+37
      %v786 = vand.u32 %v697, 2147483648
      %v787 = vor.u32 1.1754944e-38, %v786
      %v788 = vsel %vm785, %v787, %v783
      %v789 = vmul.f32 1.0, %v788
      %v790 = vrcp.pop %v698
      %v791 = vmul.f32 %v698, %v790
      %v792 = vsub.f32 1.0, %v791
      %v793 = vmul.f32 %v790, %v792
      %v794 = vadd.f32 %v790, %v793
      %vm795 = vweird.f32 %v698
      %vm796 = vweird.f32 %v790
      %vm797 = vmor %vm795, %vm796
      %v798 = vsel %vm797, %v790, %v794
      %v799 = vand.u32 2147483647, %v698
      %vm800 = vcmp.eq.f32.partialorder %v799, 8.507059e+37
      %v801 = vand.u32 %v698, 2147483648
      %v802 = vor.u32 1.1754944e-38, %v801
      %v803 = vsel %vm800, %v802, %v798
      %v804 = vmul.f32 1.0, %v803
      %v805 = vrcp.pop %v699
      %v806 = vmul.f32 %v699, %v805
      %v807 = vsub.f32 1.0, %v806
      %v808 = vmul.f32 %v805, %v807
      %v809 = vadd.f32 %v805, %v808
      %vm810 = vweird.f32 %v699
      %vm811 = vweird.f32 %v805
      %vm812 = vmor %vm810, %vm811
      %v813 = vsel %vm812, %v805, %v809
      %v814 = vand.u32 2147483647, %v699
      %vm815 = vcmp.eq.f32.partialorder %v814, 8.507059e+37
      %v816 = vand.u32 %v699, 2147483648
      %v817 = vor.u32 1.1754944e-38, %v816
      %v818 = vsel %vm815, %v817, %v813
      %v819 = vmul.f32 1.0, %v818
      %v820 = vmul.f32 %v660, %v714
      %v821 = vmul.f32 %v661, %v729
      %v822 = vmul.f32 %v662, %v744
      %v823 = vmul.f32 %v663, %v759
      %v824 = vmul.f32 %v664, %v774
      %v825 = vmul.f32 %v665, %v789
      %v826 = vmul.f32 %v666, %v804
      %v827 = vmul.f32 %v667, %v819
      %v828 = vpack.c.bf16 %v820, %v820
      %v829 = vpack.c.bf16 %v821, %v821
      %v830 = vpack.c.bf16 %v822, %v822
      %v831 = vpack.c.bf16 %v823, %v823
      %v832 = vpack.c.bf16 %v824, %v824
      %v833 = vpack.c.bf16 %v825, %v825
      %v834 = vpack.c.bf16 %v826, %v826
      %v835 = vpack.c.bf16 %v827, %v827
      %836 = vst [vmem:[%s281] sm:$0xf] %v828
      %837 = vst [vmem:[%s281 + $0x4] sm:$0xf] %v829
      %838 = vst [vmem:[%s281 + $0x8] sm:$0xf] %v830
      %839 = vst [vmem:[%s281 + $0xc] sm:$0xf] %v831
      %840 = vst [vmem:[%s281 + $0x10] sm:$0xf] %v832
      %841 = vst [vmem:[%s281 + $0x14] sm:$0xf] %v833
      %842 = vst [vmem:[%s281 + $0x18] sm:$0xf] %v834
      %843 = vst [vmem:[%s281 + $0x1c] sm:$0xf] %v835
      %s844 = smul.u32 4, %s22
      %p845 = scmp.lt.s32.totalorder %s20, 1
      %s846 = scalar_select %p845, %s20, 1
      %p847 = scmp.lt.s32.totalorder %s844, 15
      %s848 = scalar_select %p847, %s844, 15
      %p849 = scmp.lt.s32.totalorder %s21, 0
      %s850 = scalar_select %p849, %s21, 0
      %s851 = smul.addr %s848, 2
      %s852 = sadd.s32 %s850, %s851
      %s853 = smul.addr %s846, 32
      %s854 = sadd.s32 %s852, %s853
      %s855 = smul.addr %s854, 4
      %s856 = scalar_lea.vmem %s4, %s855
      // Predicated region
      $region37: #{conv_forward.1} parent=35 // pred_check
        %p857 = pneg %p160
      $region38: #{conv_forward.1} parent=35 // pred_check_branch
        %859 = sbr.rel (%p857) target = $region40
      $region39: #{conv_forward.1} parent=35 // pred_region
        %s860 = smul.u32 4, %s22
      $region40: #{conv_forward.1} parent=35 // pred_fallthru
        _
    $region36: #{conv_forward.1} parent=5 // pred_fallthru
      _
    %p861 = scmp.le.s32.totalorder 2, %s10
    // Predicated region
    $region41: #{conv_forward.1} parent=5 // pred_check
      %p862 = pneg %p861
    $region42: #{conv_forward.1} parent=5 // pred_check_branch
      %864 = sbr.rel (%p862) target = $region44
    $region43: #{conv_forward.1} parent=5 // pred_region
      %s865 = ssub.s32 %s10, 2
      // Predicated region
      $region45: #{conv_forward.1} parent=43 // pred_check
        %p866 = pneg %p166
      $region46: #{conv_forward.1} parent=43 // pred_check_branch
        %868 = sbr.rel (%p866) target = $region48
      $region47: #{conv_forward.1} parent=43 // pred_region
        %s869 = smul.u32 4, %s25
        %p870 = scmp.lt.s32.totalorder %s23, 1
        %s871 = scalar_select %p870, %s23, 1
        %p872 = scmp.lt.s32.totalorder %s869, 15
        %s873 = scalar_select %p872, %s869, 15
        %p874 = scmp.lt.s32.totalorder %s24, 0
        %s875 = scalar_select %p874, %s24, 0
        %s876 = smul.addr %s873, 2
        %s877 = sadd.s32 %s875, %s876
        %s878 = smul.addr %s871, 32
        %s879 = sadd.s32 %s877, %s878
        %s880 = smul.addr %s879, 4
        %s881 = scalar_lea.vmem %s4, %s880
      $region48: #{conv_forward.1} parent=43 // pred_fallthru
        _
    $region44: #{conv_forward.1} parent=5 // pred_fallthru
      _
  $region6: #{conv_forward.1} parent=0 // loop_footer
    %s14 = sadd.s32 1, %s10
  $region7: #{conv_forward.1} parent=0 // loop_footer_branch
    %9 = sbr.rel target = $region3
  $region8: #{conv_forward.1} parent=0 // loop_exit
    _

</llo_original>
